<compile_context>
chip_gen: v7x
topology: tpu7x:2x2x1
jax: 0.10.0
libtpu: 0.0.40
codegen_flags: <defaults>
</compile_context>

<pallas_src>
import jax
import jax.numpy as jnp
from jax import lax
from jax.experimental import pallas as pl
from jax.experimental.pallas import tpu as pltpu


def _skill_compat_kernel(ids1_ref, ids2_ref, embT_ref, w1t_ref, b1_ref,
                         w2_ref, b2_ref, out_ref):
    # ids1_ref: [n1, TB] int32, ids2_ref: [n2, TB] int32   (batch on lanes)
    # embT_ref: [D, V]  bf16   (embedding table, transposed, VMEM-resident)
    # w1t_ref:  [H, 2D] bf16,  b1_ref: [H, 1] f32
    # w2_ref:   [H, 1]  f32,   b2_ref: [1, 1] f32 (SMEM scalar)
    # out_ref:  [1, TB] f32    (lane-dense scores for this batch block)
    n1, tb = ids1_ref.shape
    n2 = ids2_ref.shape[0]
    d, v = embT_ref.shape

    vocab_iota = lax.broadcasted_iota(jnp.int32, (v, tb), 0)

    def mean_pool_t(ids_ref, n):
        # One-hot count matrix [V, TB] on the VPU, then a single MXU matmul
        # against the resident table:  emb^T [D, V] @ counts [V, TB].
        ids = ids_ref[...]
        counts = jnp.zeros((v, tb), jnp.float32)
        for s in range(n):                     # n is 4-6: fully unrolled
            counts = counts + (vocab_iota == ids[s:s + 1, :]).astype(jnp.float32)
        pooled = jnp.dot(embT_ref[...], counts.astype(jnp.bfloat16),
                         preferred_element_type=jnp.float32)
        return pooled * (1.0 / n)              # [D, TB] f32 (mean scaling)

    s1 = mean_pool_t(ids1_ref, n1)
    s2 = mean_pool_t(ids2_ref, n2)
    xt = jnp.concatenate([s1, s2], axis=0).astype(jnp.bfloat16)      # [2D, TB]

    # Linear(2D -> H) + ReLU: batch on the MXU N axis, everything lane-dense.
    h = jnp.dot(w1t_ref[...], xt, preferred_element_type=jnp.float32)  # [H, TB]
    h = jnp.maximum(h + b1_ref[...], 0.0)

    # Linear(H -> 1): VPU multiply + sublane reduce (no relayout), + Sigmoid.
    logits = jnp.sum(h * w2_ref[...], axis=0, keepdims=True) + b2_ref[0, 0]
    out_ref[...] = jax.nn.sigmoid(logits)                              # [1, TB]


def skill_compatibility_forward(skill_ids_1, skill_ids_2, params, *,
                                block_b=16384):
    """params: dict with
         'emb' : [num_skills_vocab, skill_dim]
         'w1'  : [2*skill_dim, hidden]   (transposed vs torch Linear)
         'b1'  : [hidden]
         'w2'  : [hidden, 1]
         'b2'  : [1]
       Returns compatibility scores [batch, 1] (float32).
    """
    emb = params["emb"]
    vocab, D = emb.shape
    H = params["w1"].shape[1]
    B, n1 = skill_ids_1.shape
    n2 = skill_ids_2.shape[1]

    LANE = 128
    block_b = max(LANE, (block_b // LANE) * LANE)

    # Batch tiling: lane-aligned tiles; large default so each grid step moves
    # real work.  When B fits one tile but spans >= 2 lane tiles, split into 2
    # grid steps so the "parallel" axis spans both v7x TensorCores.
    pad_b = pl.cdiv(B, LANE) * LANE
    if pad_b <= 2 * LANE:
        tb = pad_b
    elif pad_b <= 2 * block_b:
        tb = pl.cdiv(pad_b, 2 * LANE) * LANE
        pad_b = 2 * tb
    else:
        tb = block_b
        pad_b = pl.cdiv(B, tb) * tb
    n_blocks = pad_b // tb

    # Batch on the lane axis: ids transposed to [n, B] and lane-padded.
    # Pad ids are 0 (valid index); their scores are finite and sliced off.
    ids1 = jnp.pad(skill_ids_1.astype(jnp.int32).T, ((0, 0), (0, pad_b - B)))
    ids2 = jnp.pad(skill_ids_2.astype(jnp.int32).T, ((0, 0), (0, pad_b - B)))

    embT = emb.T.astype(jnp.bfloat16)                      # [D, V]
    w1t = params["w1"].T.astype(jnp.bfloat16)              # [H, 2D]
    b1 = params["b1"].reshape(H, 1).astype(jnp.float32)    # [H, 1]
    w2 = params["w2"].reshape(H, 1).astype(jnp.float32)    # [H, 1]
    b2 = params["b2"].reshape(1, 1).astype(jnp.float32)    # [1, 1] -> SMEM

    grid_spec = pltpu.PrefetchScalarGridSpec(
        num_scalar_prefetch=0,
        grid=(n_blocks,),
        in_specs=[
            pl.BlockSpec((n1, tb), lambda i: (0, i)),          # ids set 1
            pl.BlockSpec((n2, tb), lambda i: (0, i)),          # ids set 2
            pl.BlockSpec((D, vocab), lambda i: (0, 0)),        # emb^T (resident)
            pl.BlockSpec((H, 2 * D), lambda i: (0, 0)),        # W1^T
            pl.BlockSpec((H, 1), lambda i: (0, 0)),            # b1
            pl.BlockSpec((H, 1), lambda i: (0, 0)),            # w2
            pl.BlockSpec((1, 1), lambda i: (0, 0),
                         memory_space=pltpu.MemorySpace.SMEM),  # b2 scalar
        ],
        out_specs=pl.BlockSpec((1, tb), lambda i: (0, i)),     # lane-dense
    )

    cost = pl.CostEstimate(
        flops=int(pad_b * (4 * D * vocab + 4 * D * H + 2 * H)),
        transcendentals=int(pad_b),
        bytes_accessed=int(pad_b * ((n1 + n2) * 4 + 4)
                           + (vocab * D + 2 * D * H) * 2 + (2 * H + 2) * 4),
    )

    out = pl.pallas_call(
        _skill_compat_kernel,
        out_shape=jax.ShapeDtypeStruct((1, pad_b), jnp.float32),
        grid_spec=grid_spec,
        compiler_params=pltpu.CompilerParams(
            dimension_semantics=("parallel",)),
        cost_estimate=cost,
    )(ids1, ids2, embT, w1t, b1, w2, b2)

    return out[0, :B].reshape(B, 1)


def init_params(key, num_skills_vocab, skill_dim, hidden_dim):
    k0, k1, k2, k3, k4 = jax.random.split(key, 5)
    return {
        "emb": jax.random.normal(k0, (num_skills_vocab, skill_dim), jnp.float32),
        "w1": 0.1 * jax.random.normal(k1, (2 * skill_dim, hidden_dim), jnp.float32),
        "b1": 0.1 * jax.random.normal(k2, (hidden_dim,), jnp.float32),
        "w2": 0.1 * jax.random.normal(k3, (hidden_dim, 1), jnp.float32),
        "b2": 0.1 * jax.random.normal(k4, (1,), jnp.float32),
    }


def _reference(skill_ids_1, skill_ids_2, params):
    emb = params["emb"]
    s1 = jnp.take(emb, skill_ids_1, axis=0).mean(axis=1)
    s2 = jnp.take(emb, skill_ids_2, axis=0).mean(axis=1)
    combined = jnp.concatenate([s1, s2], axis=1)
    h = jnp.maximum(combined @ params["w1"] + params["b1"], 0.0)
    return jax.nn.sigmoid(h @ params["w2"] + params["b2"].reshape(1, 1))


if __name__ == "__main__":
    key = jax.random.PRNGKey(0)

    num_skills_vocab = 16
    skill_dim = 8
    hidden_dim = 32
    n1, n2 = 4, 6            # skills per person (can differ)

    kp, ki1, ki2, ki3, ki4 = jax.random.split(key, 5)
    params = init_params(kp, num_skills_vocab, skill_dim, hidden_dim)

    # Small batch: single lane-aligned block.
    batch = 16
    ids1 = jax.random.randint(ki1, (batch, n1), 0, num_skills_vocab, jnp.int32)
    ids2 = jax.random.randint(ki2, (batch, n2), 0, num_skills_vocab, jnp.int32)
    ref = _reference(ids1, ids2, params)
    out = jax.block_until_ready(skill_compatibility_forward(ids1, ids2, params))
    assert out.shape == (batch, 1)
    assert jnp.allclose(out, ref, atol=1e-2, rtol=1e-2), (out, ref)

    # Mid batch: auto-split into 2 blocks (v7x dual-TC path) + batch padding.
    batch = 300
    ids1 = jax.random.randint(ki3, (batch, n1), 0, num_skills_vocab, jnp.int32)
    ids2 = jax.random.randint(ki4, (batch, n2), 0, num_skills_vocab, jnp.int32)
    ref = _reference(ids1, ids2, params)
    out = jax.block_until_ready(skill_compatibility_forward(ids1, ids2, params))
    assert out.shape == (batch, 1)
    assert jnp.allclose(out, ref, atol=1e-2, rtol=1e-2)

    # Explicit small tile: 3-block grid exercising the tiled path.
    out_tiled = jax.block_until_ready(
        skill_compatibility_forward(ids1, ids2, params, block_b=128))
    assert out_tiled.shape == (batch, 1)
    assert jnp.allclose(out_tiled, ref, atol=1e-2, rtol=1e-2)

    print("KERNEL_OK")
</pallas_src>

<mosaic_0001>
module attributes {stable_mosaic.version = 11 : i64} {
  func.func @_skill_compat_kernel(%arg0: i32, %arg1: memref<4x128xi32, #tpu.memory_space<vmem>>, %arg2: memref<6x128xi32, #tpu.memory_space<vmem>>, %arg3: memref<8x16xbf16, #tpu.memory_space<vmem>>, %arg4: memref<32x16xbf16, #tpu.memory_space<vmem>>, %arg5: memref<32x1xf32, #tpu.memory_space<vmem>>, %arg6: memref<32x1xf32, #tpu.memory_space<vmem>>, %arg7: memref<1x1xf32, #tpu.memory_space<smem>>, %arg8: memref<1x128xf32, #tpu.memory_space<vmem>>) attributes {dimension_semantics = [#tpu.dimension_semantics<parallel>], iteration_bounds = array<i64: 1>, scalar_prefetch = 0 : i64, scratch_operands = 0 : i64, tpu.core_type = #tpu.core_type<tc>, window_params = [{transform_indices = @transform_0, window_bounds = array<i64: 4, 128>}, {transform_indices = @transform_1, window_bounds = array<i64: 6, 128>}, {pipeline_mode = #tpu.pipeline_mode<synchronous>, transform_indices = @transform_2, window_bounds = array<i64: 8, 16>}, {pipeline_mode = #tpu.pipeline_mode<synchronous>, transform_indices = @transform_3, window_bounds = array<i64: 32, 16>}, {pipeline_mode = #tpu.pipeline_mode<synchronous>, transform_indices = @transform_4, window_bounds = array<i64: 32, 1>}, {pipeline_mode = #tpu.pipeline_mode<synchronous>, transform_indices = @transform_5, window_bounds = array<i64: 32, 1>}, {transform_indices = @transform_6, window_bounds = array<i64: 1, 1>}, {transform_indices = @transform_7, window_bounds = array<i64: 1, 128>}]} {
    %0 = tpu.iota {dimensions = array<i32: 0>} : vector<16x128xi32>
    %c0 = arith.constant 0 : index
    %c0_0 = arith.constant 0 : index
    %1 = vector.load %arg1[%c0, %c0_0] : memref<4x128xi32, #tpu.memory_space<vmem>>, vector<4x128xi32>
    %cst = arith.constant 0.000000e+00 : f32
    %2 = vector.broadcast %cst : f32 to vector<16x128xf32>
    %3 = vector.extract_strided_slice %1 {offsets = [0, 0], sizes = [1, 128], strides = [1, 1]} : vector<4x128xi32> to vector<1x128xi32>
    %4 = vector.broadcast %3 : vector<1x128xi32> to vector<16x128xi32>
    %5 = arith.cmpi eq, %0, %4 : vector<16x128xi32>
    %6 = arith.extui %5 : vector<16x128xi1> to vector<16x128xi32>
    %7 = arith.sitofp %6 : vector<16x128xi32> to vector<16x128xf32>
    %8 = arith.addf %2, %7 : vector<16x128xf32>
    %9 = vector.extract_strided_slice %1 {offsets = [1, 0], sizes = [1, 128], strides = [1, 1]} : vector<4x128xi32> to vector<1x128xi32>
    %10 = vector.broadcast %9 : vector<1x128xi32> to vector<16x128xi32>
    %11 = arith.cmpi eq, %0, %10 : vector<16x128xi32>
    %12 = arith.extui %11 : vector<16x128xi1> to vector<16x128xi32>
    %13 = arith.sitofp %12 : vector<16x128xi32> to vector<16x128xf32>
    %14 = arith.addf %8, %13 : vector<16x128xf32>
    %15 = vector.extract_strided_slice %1 {offsets = [2, 0], sizes = [1, 128], strides = [1, 1]} : vector<4x128xi32> to vector<1x128xi32>
    %16 = vector.broadcast %15 : vector<1x128xi32> to vector<16x128xi32>
    %17 = arith.cmpi eq, %0, %16 : vector<16x128xi32>
    %18 = arith.extui %17 : vector<16x128xi1> to vector<16x128xi32>
    %19 = arith.sitofp %18 : vector<16x128xi32> to vector<16x128xf32>
    %20 = arith.addf %14, %19 : vector<16x128xf32>
    %21 = vector.extract_strided_slice %1 {offsets = [3, 0], sizes = [1, 128], strides = [1, 1]} : vector<4x128xi32> to vector<1x128xi32>
    %22 = vector.broadcast %21 : vector<1x128xi32> to vector<16x128xi32>
    %23 = arith.cmpi eq, %0, %22 : vector<16x128xi32>
    %24 = arith.extui %23 : vector<16x128xi1> to vector<16x128xi32>
    %25 = arith.sitofp %24 : vector<16x128xi32> to vector<16x128xf32>
    %26 = arith.addf %20, %25 : vector<16x128xf32>
    %c0_1 = arith.constant 0 : index
    %c0_2 = arith.constant 0 : index
    %27 = vector.load %arg3[%c0_1, %c0_2] : memref<8x16xbf16, #tpu.memory_space<vmem>>, vector<8x16xbf16>
    %28 = arith.truncf %26 : vector<16x128xf32> to vector<16x128xbf16>
    %cst_3 = arith.constant dense<0.000000e+00> : vector<8x128xf32>
    %29 = tpu.matmul %27, %28, %cst_3 {dimension_numbers = #tpu.dot_dimension_numbers<[1], [0], [0], [1], [0, 0, 1, 1], [], []>} : vector<8x16xbf16>, vector<16x128xbf16>, vector<8x128xf32> -> vector<8x128xf32>
    %cst_4 = arith.constant 2.500000e-01 : f32
    %30 = vector.broadcast %cst_4 : f32 to vector<8x128xf32>
    %31 = arith.mulf %29, %30 : vector<8x128xf32>
    %c0_5 = arith.constant 0 : index
    %c0_6 = arith.constant 0 : index
    %32 = vector.load %arg2[%c0_5, %c0_6] : memref<6x128xi32, #tpu.memory_space<vmem>>, vector<6x128xi32>
    %cst_7 = arith.constant 0.000000e+00 : f32
    %33 = vector.broadcast %cst_7 : f32 to vector<16x128xf32>
    %34 = vector.extract_strided_slice %32 {offsets = [0, 0], sizes = [1, 128], strides = [1, 1]} : vector<6x128xi32> to vector<1x128xi32>
    %35 = vector.broadcast %34 : vector<1x128xi32> to vector<16x128xi32>
    %36 = arith.cmpi eq, %0, %35 : vector<16x128xi32>
    %37 = arith.extui %36 : vector<16x128xi1> to vector<16x128xi32>
    %38 = arith.sitofp %37 : vector<16x128xi32> to vector<16x128xf32>
    %39 = arith.addf %33, %38 : vector<16x128xf32>
    %40 = vector.extract_strided_slice %32 {offsets = [1, 0], sizes = [1, 128], strides = [1, 1]} : vector<6x128xi32> to vector<1x128xi32>
    %41 = vector.broadcast %40 : vector<1x128xi32> to vector<16x128xi32>
    %42 = arith.cmpi eq, %0, %41 : vector<16x128xi32>
    %43 = arith.extui %42 : vector<16x128xi1> to vector<16x128xi32>
    %44 = arith.sitofp %43 : vector<16x128xi32> to vector<16x128xf32>
    %45 = arith.addf %39, %44 : vector<16x128xf32>
    %46 = vector.extract_strided_slice %32 {offsets = [2, 0], sizes = [1, 128], strides = [1, 1]} : vector<6x128xi32> to vector<1x128xi32>
    %47 = vector.broadcast %46 : vector<1x128xi32> to vector<16x128xi32>
    %48 = arith.cmpi eq, %0, %47 : vector<16x128xi32>
    %49 = arith.extui %48 : vector<16x128xi1> to vector<16x128xi32>
    %50 = arith.sitofp %49 : vector<16x128xi32> to vector<16x128xf32>
    %51 = arith.addf %45, %50 : vector<16x128xf32>
    %52 = vector.extract_strided_slice %32 {offsets = [3, 0], sizes = [1, 128], strides = [1, 1]} : vector<6x128xi32> to vector<1x128xi32>
    %53 = vector.broadcast %52 : vector<1x128xi32> to vector<16x128xi32>
    %54 = arith.cmpi eq, %0, %53 : vector<16x128xi32>
    %55 = arith.extui %54 : vector<16x128xi1> to vector<16x128xi32>
    %56 = arith.sitofp %55 : vector<16x128xi32> to vector<16x128xf32>
    %57 = arith.addf %51, %56 : vector<16x128xf32>
    %58 = vector.extract_strided_slice %32 {offsets = [4, 0], sizes = [1, 128], strides = [1, 1]} : vector<6x128xi32> to vector<1x128xi32>
    %59 = vector.broadcast %58 : vector<1x128xi32> to vector<16x128xi32>
    %60 = arith.cmpi eq, %0, %59 : vector<16x128xi32>
    %61 = arith.extui %60 : vector<16x128xi1> to vector<16x128xi32>
    %62 = arith.sitofp %61 : vector<16x128xi32> to vector<16x128xf32>
    %63 = arith.addf %57, %62 : vector<16x128xf32>
    %64 = vector.extract_strided_slice %32 {offsets = [5, 0], sizes = [1, 128], strides = [1, 1]} : vector<6x128xi32> to vector<1x128xi32>
    %65 = vector.broadcast %64 : vector<1x128xi32> to vector<16x128xi32>
    %66 = arith.cmpi eq, %0, %65 : vector<16x128xi32>
    %67 = arith.extui %66 : vector<16x128xi1> to vector<16x128xi32>
    %68 = arith.sitofp %67 : vector<16x128xi32> to vector<16x128xf32>
    %69 = arith.addf %63, %68 : vector<16x128xf32>
    %c0_8 = arith.constant 0 : index
    %c0_9 = arith.constant 0 : index
    %70 = vector.load %arg3[%c0_8, %c0_9] : memref<8x16xbf16, #tpu.memory_space<vmem>>, vector<8x16xbf16>
    %71 = arith.truncf %69 : vector<16x128xf32> to vector<16x128xbf16>
    %cst_10 = arith.constant dense<0.000000e+00> : vector<8x128xf32>
    %72 = tpu.matmul %70, %71, %cst_10 {dimension_numbers = #tpu.dot_dimension_numbers<[1], [0], [0], [1], [0, 0, 1, 1], [], []>} : vector<8x16xbf16>, vector<16x128xbf16>, vector<8x128xf32> -> vector<8x128xf32>
    %cst_11 = arith.constant 0.166666672 : f32
    %73 = vector.broadcast %cst_11 : f32 to vector<8x128xf32>
    %74 = arith.mulf %72, %73 : vector<8x128xf32>
    %75 = tpu.concatenate %31, %74 in 0 : vector<8x128xf32>, vector<8x128xf32> -> vector<16x128xf32>
    %76 = arith.truncf %75 : vector<16x128xf32> to vector<16x128xbf16>
    %c0_12 = arith.constant 0 : index
    %c0_13 = arith.constant 0 : index
    %77 = vector.load %arg4[%c0_12, %c0_13] : memref<32x16xbf16, #tpu.memory_space<vmem>>, vector<32x16xbf16>
    %cst_14 = arith.constant dense<0.000000e+00> : vector<32x128xf32>
    %78 = tpu.matmul %77, %76, %cst_14 {dimension_numbers = #tpu.dot_dimension_numbers<[1], [0], [0], [1], [0, 0, 1, 1], [], []>} : vector<32x16xbf16>, vector<16x128xbf16>, vector<32x128xf32> -> vector<32x128xf32>
    %c0_15 = arith.constant 0 : index
    %c0_16 = arith.constant 0 : index
    %79 = vector.load %arg5[%c0_15, %c0_16] : memref<32x1xf32, #tpu.memory_space<vmem>>, vector<32x1xf32>
    %80 = vector.broadcast %79 : vector<32x1xf32> to vector<32x128xf32>
    %81 = arith.addf %78, %80 : vector<32x128xf32>
    %cst_17 = arith.constant 0.000000e+00 : f32
    %82 = vector.broadcast %cst_17 : f32 to vector<32x128xf32>
    %83 = arith.maximumf %81, %82 : vector<32x128xf32>
    %c0_18 = arith.constant 0 : index
    %c0_19 = arith.constant 0 : index
    %84 = vector.load %arg6[%c0_18, %c0_19] : memref<32x1xf32, #tpu.memory_space<vmem>>, vector<32x1xf32>
    %85 = vector.broadcast %84 : vector<32x1xf32> to vector<32x128xf32>
    %86 = arith.mulf %83, %85 : vector<32x128xf32>
    %cst_20 = arith.constant dense<0.000000e+00> : vector<128xf32>
    %87 = vector.multi_reduction <add>, %86, %cst_20 [0] : vector<32x128xf32> to vector<128xf32>
    %88 = vector.shape_cast %87 : vector<128xf32> to vector<1x128xf32>
    %c0_21 = arith.constant 0 : index
    %c0_22 = arith.constant 0 : index
    %89 = memref.load %arg7[%c0_21, %c0_22] : memref<1x1xf32, #tpu.memory_space<smem>>
    %90 = vector.broadcast %89 : f32 to vector<1x128xf32>
    %91 = arith.addf %88, %90 : vector<1x128xf32>
    %92 = arith.negf %91 : vector<1x128xf32>
    %93 = math.exp %92 : vector<1x128xf32>
    %cst_23 = arith.constant 1.000000e+00 : f32
    %94 = vector.broadcast %cst_23 : f32 to vector<1x128xf32>
    %95 = arith.addf %94, %93 : vector<1x128xf32>
    %96 = arith.divf %94, %95 : vector<1x128xf32>
    %c0_24 = arith.constant 0 : index
    %c0_25 = arith.constant 0 : index
    %97 = vector.load %arg8[%c0_24, %c0_25] : memref<1x128xf32, #tpu.memory_space<vmem>>, vector<1x128xf32>
    tpu.vector_store %arg8[%c0_24, %c0_25], %96 {strides = array<i32>} : memref<1x128xf32, #tpu.memory_space<vmem>>, vector<1x128xf32>,
    return
  }
  func.func @transform_0(%arg0: i32) -> (i32, i32) {
    %c0_i32 = arith.constant 0 : i32
    %c0_i32_0 = arith.constant 0 : i32
    return %c0_i32, %arg0 : i32, i32
  }
  func.func @transform_1(%arg0: i32) -> (i32, i32) {
    %c0_i32 = arith.constant 0 : i32
    %c0_i32_0 = arith.constant 0 : i32
    return %c0_i32, %arg0 : i32, i32
  }
  func.func @transform_2(%arg0: i32) -> (i32, i32) {
    %c0_i32 = arith.constant 0 : i32
    %c0_i32_0 = arith.constant 0 : i32
    %c0_i32_1 = arith.constant 0 : i32
    return %c0_i32, %c0_i32_0 : i32, i32
  }
  func.func @transform_3(%arg0: i32) -> (i32, i32) {
    %c0_i32 = arith.constant 0 : i32
    %c0_i32_0 = arith.constant 0 : i32
    %c0_i32_1 = arith.constant 0 : i32
    return %c0_i32, %c0_i32_0 : i32, i32
  }
  func.func @transform_4(%arg0: i32) -> (i32, i32) {
    %c0_i32 = arith.constant 0 : i32
    %c0_i32_0 = arith.constant 0 : i32
    %c0_i32_1 = arith.constant 0 : i32
    return %c0_i32, %c0_i32_0 : i32, i32
  }
  func.func @transform_5(%arg0: i32) -> (i32, i32) {
    %c0_i32 = arith.constant 0 : i32
    %c0_i32_0 = arith.constant 0 : i32
    %c0_i32_1 = arith.constant 0 : i32
    return %c0_i32, %c0_i32_0 : i32, i32
  }
  func.func @transform_6(%arg0: i32) -> (i32, i32) {
    %c0_i32 = arith.constant 0 : i32
    %c0_i32_0 = arith.constant 0 : i32
    %c0_i32_1 = arith.constant 0 : i32
    return %c0_i32, %c0_i32_0 : i32, i32
  }
  func.func @transform_7(%arg0: i32) -> (i32, i32) {
    %c0_i32 = arith.constant 0 : i32
    %c0_i32_0 = arith.constant 0 : i32
    return %c0_i32, %arg0 : i32, i32
  }
}

</mosaic_0001>

<llo_original>
// kernel: tpu_custom_call.1
$region0: #{tpu_custom_call.1}
  #allocation0 [shape = 'u32[]', space=smem, size = 0x4, offset = 0x4, fixed_abs, tag = 'smem constant byte address 0x4 - core index']
  #allocation1 [shape = 'u32[144,128]{1,0:T(1,128)}', space=vmem, size = 0x12000, scoped, tag = 'internal scratch']
  #allocation2 [shape = 'f32[1,1]{1,0:T(1,128)S(6)}', space=smem, size = 0x200, scoped, tag = 'scoped memory for tpu_custom_call.1']
  %s0 = inlined_call_operand.vmem [shape: s32[4,128], index: 0, kind: input, shape index: {}]
  %s1 = inlined_call_operand.vmem [shape: s32[6,128], index: 1, kind: input, shape index: {}]
  %s2 = inlined_call_operand.vmem [shape: bf16[8,16], index: 2, kind: input, shape index: {}]
  %s3 = inlined_call_operand.vmem [shape: bf16[32,16], index: 3, kind: input, shape index: {}]
  %s4 = inlined_call_operand.vmem [shape: f32[32,1], index: 4, kind: input, shape index: {}]
  %s5 = inlined_call_operand.vmem [shape: f32[32,1], index: 5, kind: input, shape index: {}]
  %s6 = inlined_call_operand.<no memory space> [shape: f32[1,1], index: 6, kind: input, shape index: {}]
  %s7 = inlined_call_operand.hbm [shape: f32[1,128], index: 7, kind: output, shape index: {}]
  %s8 = sld [smem:[#allocation0]]
  $region38: #{tpu_custom_call.1} parent=0
    _
  %s10 = ssub.s32 1, %s8
  %s11 = scalar_select 0, %s10, %s8
  %12 = sst [smem:[#allocation2]] %s6
  $region1: #{tpu_custom_call.1} parent=0
    #allocation3 [shape = 'u8[512]{0}', space=vmem, size = 0x400, scoped, tag = 'output window, operand 0, single buffered']
    #allocation4 [shape = 's32[1]{0}', space=sflag, size = 0x4, scoped, tag = 'scoped memory for tpu_custom_call.1']
    %13 = vsyncpa [#allocation4], 0
    // Predicated region
    $region2: #{tpu_custom_call.1} parent=1 // pred_check
      _
    $region3: #{tpu_custom_call.1} parent=1 // pred_check_branch
      %15 = sbr.rel (0) target = $region5
    $region4: #{tpu_custom_call.1} parent=1 // pred_region
      _
    $region5: #{tpu_custom_call.1} parent=1 // pred_fallthru
      _
    // Predicated region
    $region6: #{tpu_custom_call.1} parent=1 // pred_check
      _
    $region7: #{tpu_custom_call.1} parent=1 // pred_check_branch
      %17 = sbr.rel (0) target = $region9
    $region8: #{tpu_custom_call.1} parent=1 // pred_region
      _
    $region9: #{tpu_custom_call.1} parent=1 // pred_fallthru
      _
    // Predicated region
    $region10: #{tpu_custom_call.1} parent=1 // pred_check
      _
    $region11: #{tpu_custom_call.1} parent=1 // pred_check_branch
      %19 = sbr.rel (0) target = $region13
    $region12: #{tpu_custom_call.1} parent=1 // pred_region
      _
    $region13: #{tpu_custom_call.1} parent=1 // pred_fallthru
      _
    // Predicated region
    $region14: #{tpu_custom_call.1} parent=1 // pred_check
      _
    $region15: #{tpu_custom_call.1} parent=1 // pred_check_branch
      %21 = sbr.rel (0) target = $region17
    $region16: #{tpu_custom_call.1} parent=1 // pred_region
      _
    $region17: #{tpu_custom_call.1} parent=1 // pred_fallthru
      _
    // Predicated region
    $region18: #{tpu_custom_call.1} parent=1 // pred_check
      _
    $region19: #{tpu_custom_call.1} parent=1 // pred_check_branch
      %23 = sbr.rel (0) target = $region21
    $region20: #{tpu_custom_call.1} parent=1 // pred_region
      _
    $region21: #{tpu_custom_call.1} parent=1 // pred_fallthru
      _
    // Predicated region
    $region22: #{tpu_custom_call.1} parent=1 // pred_check
      _
    $region23: #{tpu_custom_call.1} parent=1 // pred_check_branch
      %25 = sbr.rel (0) target = $region25
    $region24: #{tpu_custom_call.1} parent=1 // pred_region
      _
    $region25: #{tpu_custom_call.1} parent=1 // pred_fallthru
      _
    // Predicated region
    $region26: #{tpu_custom_call.1} parent=1 // pred_check
      _
    $region27: #{tpu_custom_call.1} parent=1 // pred_check_branch
      %27 = sbr.rel (0) target = $region29
    $region28: #{tpu_custom_call.1} parent=1 // pred_region
      _
    $region29: #{tpu_custom_call.1} parent=1 // pred_fallthru
      _
    %v29 = vlaneseq
    %v30 = vshrl.u32 %v29, 7
    %v31 = vadd.s32 %v30, 8
    %v32 = vld [vmem:[%s0] sm:$0xf]
    %v33 = vlaneseq
    %v34 = vshrl.u32 %v33, 7
    %v35 = vsub.s32 0, %v34
    %v36 = vrot.slane %v32, %v35
    %vm37 = vcmp.eq.s32.totalorder %v30, %v36
    %vm38 = vcmp.eq.s32.totalorder %v31, %v36
    %v39 = vsel %vm37, 1, 0
    %v40 = vsel %vm38, 1, 0
    %v41 = vcvt.s32.f32 %v39
    %v42 = vcvt.s32.f32 %v40
    %v43 = vadd.f32 %v41, 0.0
    %v44 = vadd.f32 %v42, 0.0
    %v45 = vlaneseq
    %v46 = vshrl.u32 %v45, 7
    %v47 = vsub.s32 1, %v46
    %v48 = vrot.slane %v32, %v47
    %vm49 = vcmp.eq.s32.totalorder %v30, %v48
    %vm50 = vcmp.eq.s32.totalorder %v31, %v48
    %v51 = vsel %vm49, 1, 0
    %v52 = vsel %vm50, 1, 0
    %v53 = vcvt.s32.f32 %v51
    %v54 = vcvt.s32.f32 %v52
    %v55 = vadd.f32 %v43, %v53
    %v56 = vadd.f32 %v44, %v54
    %v57 = vlaneseq
    %v58 = vshrl.u32 %v57, 7
    %v59 = vsub.s32 2, %v58
    %v60 = vrot.slane %v32, %v59
    %vm61 = vcmp.eq.s32.totalorder %v30, %v60
    %vm62 = vcmp.eq.s32.totalorder %v31, %v60
    %v63 = vsel %vm61, 1, 0
    %v64 = vsel %vm62, 1, 0
    %v65 = vcvt.s32.f32 %v63
    %v66 = vcvt.s32.f32 %v64
    %v67 = vadd.f32 %v55, %v65
    %v68 = vadd.f32 %v56, %v66
    %v69 = vlaneseq
    %v70 = vshrl.u32 %v69, 7
    %v71 = vsub.s32 3, %v70
    %v72 = vrot.slane %v32, %v71
    %vm73 = vcmp.eq.s32.totalorder %v30, %v72
    %vm74 = vcmp.eq.s32.totalorder %v31, %v72
    %v75 = vsel %vm73, 1, 0
    %v76 = vsel %vm74, 1, 0
    %v77 = vcvt.s32.f32 %v75
    %v78 = vcvt.s32.f32 %v76
    %v79 = vadd.f32 %v67, %v77
    %v80 = vadd.f32 %v68, %v78
    %v81 = vld [vmem:[%s2] sm:$0xf]
    %v82 = vpack.c.bf16 %v80, %v79
    %vm83 = vcmask 130048
    %v85 = vsel %vm83, %v81, 0
    %87 = vmatprep.subr.bf16.mxu0 0
    %88 = vmatpush1.bf16.msra.mxu0 %v82
    %89 = vmatprep.subr.bf16.mxu0 0
    %90 = vmatpush1.bf16.msra.mxu0 0
    %91 = vmatprep.subr.bf16.mxu0 0
    %92 = vmatpush1.bf16.msra.mxu0 0
    %93 = vmatprep.subr.bf16.mxu0 0
    %94 = vmatpush1.bf16.msra.mxu0 0
    %95 = vmatprep.subr.bf16.mxu0 0
    %96 = vmatpush1.bf16.msra.mxu0 0
    %97 = vmatprep.subr.bf16.mxu0 0
    %98 = vmatpush1.bf16.msra.mxu0 0
    %99 = vmatprep.subr.bf16.mxu0 0
    %100 = vmatpush1.bf16.msra.mxu0 0
    %101 = vmatprep.subr.bf16.mxu0 0
    %102 = vmatpush1.bf16.msra.mxu0 0
    %103 = vmatprep.subr.bf16.mxu0 0
    %104 = vmatpush1.bf16.msra.mxu0 0
    %105 = vmatprep.subr.bf16.mxu0 0
    %106 = vmatpush1.bf16.msra.mxu0 0
    %107 = vmatprep.subr.bf16.mxu0 0
    %108 = vmatpush1.bf16.msra.mxu0 0
    %109 = vmatprep.subr.bf16.mxu0 0
    %110 = vmatpush1.bf16.msra.mxu0 0
    %111 = vmatprep.subr.bf16.mxu0 0
    %112 = vmatpush1.bf16.msra.mxu0 0
    %113 = vmatprep.subr.bf16.mxu0 0
    %114 = vmatpush1.bf16.msra.mxu0 0
    %115 = vmatprep.subr.bf16.mxu0 0
    %116 = vmatpush1.bf16.msra.mxu0 0
    %117 = vmatprep.subr.bf16.mxu0 0
    %118 = vmatpush1.bf16.msra.mxu0 0
    %119 = vmatprep.mubr.bf16.mxu0 0
    %120 = vmatmul.mubr.bf16.gmra.mrb[0].mxu0 %v85
    %v121 = vpop.f32.mrb[0].mxu0
    %v122 = vadd.f32 0.0, %v121
    %v123 = vpop.f32.mrb[0].mxu0
    %v124 = vpop.f32.mrb[0].mxu0
    %v125 = vpop.f32.mrb[0].mxu0
    %126 = vdwg.mxu0
    %v127 = vmul.f32 %v122, 0.25
    %v128 = vld [vmem:[%s1] sm:$0x3f]
    %v129 = vlaneseq
    %v130 = vshrl.u32 %v129, 7
    %v131 = vsub.s32 0, %v130
    %v132 = vrot.slane %v128, %v131
    %vm133 = vcmp.eq.s32.totalorder %v30, %v132
    %vm134 = vcmp.eq.s32.totalorder %v31, %v132
    %v135 = vsel %vm133, 1, 0
    %v136 = vsel %vm134, 1, 0
    %v137 = vcvt.s32.f32 %v135
    %v138 = vcvt.s32.f32 %v136
    %v139 = vadd.f32 %v137, 0.0
    %v140 = vadd.f32 %v138, 0.0
    %v141 = vlaneseq
    %v142 = vshrl.u32 %v141, 7
    %v143 = vsub.s32 1, %v142
    %v144 = vrot.slane %v128, %v143
    %vm145 = vcmp.eq.s32.totalorder %v30, %v144
    %vm146 = vcmp.eq.s32.totalorder %v31, %v144
    %v147 = vsel %vm145, 1, 0
    %v148 = vsel %vm146, 1, 0
    %v149 = vcvt.s32.f32 %v147
    %v150 = vcvt.s32.f32 %v148
    %v151 = vadd.f32 %v139, %v149
    %v152 = vadd.f32 %v140, %v150
    %v153 = vlaneseq
    %v154 = vshrl.u32 %v153, 7
    %v155 = vsub.s32 2, %v154
    %v156 = vrot.slane %v128, %v155
    %vm157 = vcmp.eq.s32.totalorder %v30, %v156
    %vm158 = vcmp.eq.s32.totalorder %v31, %v156
    %v159 = vsel %vm157, 1, 0
    %v160 = vsel %vm158, 1, 0
    %v161 = vcvt.s32.f32 %v159
    %v162 = vcvt.s32.f32 %v160
    %v163 = vadd.f32 %v151, %v161
    %v164 = vadd.f32 %v152, %v162
    %v165 = vlaneseq
    %v166 = vshrl.u32 %v165, 7
    %v167 = vsub.s32 3, %v166
    %v168 = vrot.slane %v128, %v167
    %vm169 = vcmp.eq.s32.totalorder %v30, %v168
    %vm170 = vcmp.eq.s32.totalorder %v31, %v168
    %v171 = vsel %vm169, 1, 0
    %v172 = vsel %vm170, 1, 0
    %v173 = vcvt.s32.f32 %v171
    %v174 = vcvt.s32.f32 %v172
    %v175 = vadd.f32 %v163, %v173
    %v176 = vadd.f32 %v164, %v174
    %v177 = vlaneseq
    %v178 = vshrl.u32 %v177, 7
    %v179 = vsub.s32 4, %v178
    %v180 = vrot.slane %v128, %v179
    %vm181 = vcmp.eq.s32.totalorder %v30, %v180
    %vm182 = vcmp.eq.s32.totalorder %v31, %v180
    %v183 = vsel %vm181, 1, 0
    %v184 = vsel %vm182, 1, 0
    %v185 = vcvt.s32.f32 %v183
    %v186 = vcvt.s32.f32 %v184
    %v187 = vadd.f32 %v175, %v185
    %v188 = vadd.f32 %v176, %v186
    %v189 = vlaneseq
    %v190 = vshrl.u32 %v189, 7
    %v191 = vsub.s32 5, %v190
    %v192 = vrot.slane %v128, %v191
    %vm193 = vcmp.eq.s32.totalorder %v30, %v192
    %vm194 = vcmp.eq.s32.totalorder %v31, %v192
    %v195 = vsel %vm193, 1, 0
    %v196 = vsel %vm194, 1, 0
    %v197 = vcvt.s32.f32 %v195
    %v198 = vcvt.s32.f32 %v196
    %v199 = vadd.f32 %v187, %v197
    %v200 = vadd.f32 %v188, %v198
    %v201 = vpack.c.bf16 %v200, %v199
    %202 = vmatprep.subr.bf16.mxu0 0
    %203 = vmatpush1.bf16.msra.mxu0 %v201
    %204 = vmatprep.subr.bf16.mxu0 0
    %205 = vmatpush1.bf16.msra.mxu0 0
    %206 = vmatprep.subr.bf16.mxu0 0
    %207 = vmatpush1.bf16.msra.mxu0 0
    %208 = vmatprep.subr.bf16.mxu0 0
    %209 = vmatpush1.bf16.msra.mxu0 0
    %210 = vmatprep.subr.bf16.mxu0 0
    %211 = vmatpush1.bf16.msra.mxu0 0
    %212 = vmatprep.subr.bf16.mxu0 0
    %213 = vmatpush1.bf16.msra.mxu0 0
    %214 = vmatprep.subr.bf16.mxu0 0
    %215 = vmatpush1.bf16.msra.mxu0 0
    %216 = vmatprep.subr.bf16.mxu0 0
    %217 = vmatpush1.bf16.msra.mxu0 0
    %218 = vmatprep.subr.bf16.mxu0 0
    %219 = vmatpush1.bf16.msra.mxu0 0
    %220 = vmatprep.subr.bf16.mxu0 0
    %221 = vmatpush1.bf16.msra.mxu0 0
    %222 = vmatprep.subr.bf16.mxu0 0
    %223 = vmatpush1.bf16.msra.mxu0 0
    %224 = vmatprep.subr.bf16.mxu0 0
    %225 = vmatpush1.bf16.msra.mxu0 0
    %226 = vmatprep.subr.bf16.mxu0 0
    %227 = vmatpush1.bf16.msra.mxu0 0
    %228 = vmatprep.subr.bf16.mxu0 0
    %229 = vmatpush1.bf16.msra.mxu0 0
    %230 = vmatprep.subr.bf16.mxu0 0
    %231 = vmatpush1.bf16.msra.mxu0 0
    %232 = vmatprep.subr.bf16.mxu0 0
    %233 = vmatpush1.bf16.msra.mxu0 0
    %234 = vmatprep.mubr.bf16.mxu0 0
    %235 = vmatmul.mubr.bf16.gmra.mrb[0].mxu0 %v85
    %v236 = vpop.f32.mrb[0].mxu0
    %v237 = vadd.f32 0.0, %v236
    %v238 = vpop.f32.mrb[0].mxu0
    %v239 = vpop.f32.mrb[0].mxu0
    %v240 = vpop.f32.mrb[0].mxu0
    %241 = vdwg.mxu0
    %v242 = vmul.f32 %v237, 0.16666667
    %v243 = vpack.c.bf16 %v242, %v127
    %v244 = vld [vmem:[%s3] sm:$0xf]
    %v245 = vld [vmem:[%s3 + $0x4] sm:$0xf]
    %v246 = vld [vmem:[%s3 + $0x8] sm:$0xf]
    %v247 = vld [vmem:[%s3 + $0xc] sm:$0xf]
    %v248 = vld [vmem:[%s4] sm:$0xff]
    %v249 = vld [vmem:[%s4 + $0x8] sm:$0xff]
    %v250 = vld [vmem:[%s4 + $0x10] sm:$0xff]
    %v251 = vld [vmem:[%s4 + $0x18] sm:$0xff]
    %253 = vset.pattern.permute.xlu0 0
    %254 = vperm.xlu0 %253, %v248
    %v255 = vpop.permute.xlu0 %254
    %258 = vset.pattern.permute.xlu0 0
    %259 = vperm.xlu0 %258, %v249
    %v260 = vpop.permute.xlu0 %259
    %263 = vset.pattern.permute.xlu0 0
    %264 = vperm.xlu0 %263, %v250
    %v265 = vpop.permute.xlu0 %264
    %268 = vset.pattern.permute.xlu0 0
    %269 = vperm.xlu0 %268, %v251
    %v270 = vpop.permute.xlu0 %269
    %v276 = vunpack.c.l.b16 %v244
    %v277 = vunpack.c.l.b16 %v245
    %v278 = vunpack.c.l.b16 %v246
    %v279 = vunpack.c.l.b16 %v247
    %v280 = vpack.c.b16 %v277, %v276
    %v281 = vpack.c.b16 %v279, %v278
    %v283 = vsel %vm83, %v280, 0
    %v286 = vsel %vm83, %v281, 0
    %288 = vmatprep.subr.bf16.mxu0 0
    %289 = vmatpush1.bf16.msra.mxu0 %v243
    %290 = vmatprep.subr.bf16.mxu0 0
    %291 = vmatpush1.bf16.msra.mxu0 0
    %292 = vmatprep.subr.bf16.mxu0 0
    %293 = vmatpush1.bf16.msra.mxu0 0
    %294 = vmatprep.subr.bf16.mxu0 0
    %295 = vmatpush1.bf16.msra.mxu0 0
    %296 = vmatprep.subr.bf16.mxu0 0
    %297 = vmatpush1.bf16.msra.mxu0 0
    %298 = vmatprep.subr.bf16.mxu0 0
    %299 = vmatpush1.bf16.msra.mxu0 0
    %300 = vmatprep.subr.bf16.mxu0 0
    %301 = vmatpush1.bf16.msra.mxu0 0
    %302 = vmatprep.subr.bf16.mxu0 0
    %303 = vmatpush1.bf16.msra.mxu0 0
    %304 = vmatprep.subr.bf16.mxu0 0
    %305 = vmatpush1.bf16.msra.mxu0 0
    %306 = vmatprep.subr.bf16.mxu0 0
    %307 = vmatpush1.bf16.msra.mxu0 0
    %308 = vmatprep.subr.bf16.mxu0 0
    %309 = vmatpush1.bf16.msra.mxu0 0
    %310 = vmatprep.subr.bf16.mxu0 0
    %311 = vmatpush1.bf16.msra.mxu0 0
    %312 = vmatprep.subr.bf16.mxu0 0
    %313 = vmatpush1.bf16.msra.mxu0 0
    %314 = vmatprep.subr.bf16.mxu0 0
    %315 = vmatpush1.bf16.msra.mxu0 0
    %316 = vmatprep.subr.bf16.mxu0 0
    %317 = vmatpush1.bf16.msra.mxu0 0
    %318 = vmatprep.subr.bf16.mxu0 0
    %319 = vmatpush1.bf16.msra.mxu0 0
    %320 = vmatprep.mubr.bf16.mxu0 0
    %321 = vmatmul.mubr.bf16.gmra.mrb[0].mxu0 %v283
    %v322 = vpop.f32.mrb[0].mxu0
    %v323 = vadd.f32 %v255, %v322
    %v324 = vpop.f32.mrb[0].mxu0
    %v325 = vpop.f32.mrb[0].mxu0
    %v326 = vadd.f32 %v260, %v325
    %v327 = vpop.f32.mrb[0].mxu0
    %328 = vmatprep.mubr.bf16.mxu0 0
    %329 = vmatmul.mubr.bf16.gmra.mrb[0].mxu0 %v286
    %v330 = vpop.f32.mrb[0].mxu0
    %v331 = vadd.f32 %v265, %v330
    %v332 = vpop.f32.mrb[0].mxu0
    %v333 = vpop.f32.mrb[0].mxu0
    %v334 = vadd.f32 %v270, %v333
    %v335 = vpop.f32.mrb[0].mxu0
    %336 = vdwg.mxu0
    %v337 = vmax.f32 %v323, 0.0
    %v338 = vmax.f32 %v326, 0.0
    %v339 = vmax.f32 %v331, 0.0
    %v340 = vmax.f32 %v334, 0.0
    %v341 = vld [vmem:[%s5] sm:$0xff]
    %v342 = vld [vmem:[%s5 + $0x8] sm:$0xff]
    %v343 = vld [vmem:[%s5 + $0x10] sm:$0xff]
    %v344 = vld [vmem:[%s5 + $0x18] sm:$0xff]
    %346 = vset.pattern.permute.xlu0 0
    %347 = vperm.xlu0 %346, %v341
    %v348 = vpop.permute.xlu0 %347
    %351 = vset.pattern.permute.xlu0 0
    %352 = vperm.xlu0 %351, %v342
    %v353 = vpop.permute.xlu0 %352
    %356 = vset.pattern.permute.xlu0 0
    %357 = vperm.xlu0 %356, %v343
    %v358 = vpop.permute.xlu0 %357
    %361 = vset.pattern.permute.xlu0 0
    %362 = vperm.xlu0 %361, %v344
    %v363 = vpop.permute.xlu0 %362
    %v365 = vmul.f32 %v337, %v348
    %v366 = vmul.f32 %v338, %v353
    %v367 = vmul.f32 %v339, %v358
    %v368 = vmul.f32 %v340, %v363
    %v369 = vadd.f32 %v365, %v366
    %v370 = vadd.f32 %v369, %v367
    %v371 = vadd.f32 %v370, %v368
    %v372 = vrot.slane %v371, 4
    %v373 = vadd.f32 %v371, %v372
    %v374 = vrot.slane %v373, 2
    %v375 = vadd.f32 %v373, %v374
    %v376 = vrot.slane %v375, 1
    %v377 = vadd.f32 %v375, %v376
    %s378 = sld [smem:[#allocation2]]
    %v379 = vstv %s378
    %v380 = vadd.f32 %v377, %v379
    %v381 = vxor.u32 %v380, 2147483648
    %v382 = vmul.f32 %v381, 1.442695
    %v383 = vpow.pop %v382
    %v384 = vadd.f32 %v383, 1.0
    %v385 = vrcp.pop %v384
    %v386 = vmul.f32 1.0, %v385
    %387 = vst [vmem:[#allocation3] sm:$0x1] %v386
    // Predicated region
    $region30: #{tpu_custom_call.1} parent=1 // pred_check
      _
    $region31: #{tpu_custom_call.1} parent=1 // pred_check_branch
      %389 = sbr.rel (0) target = $region33
    $region32: #{tpu_custom_call.1} parent=1 // pred_region
      %s391 = ssub.s32 16, 16
      %392 = vsyncadd [#allocation4], %s391
      %s394 = sshll.u32 [#allocation3], 4
      %s395 = int_to_ptr.vmem [resolvable:$true] %s394
      %397 = dma.vmem_to_hbm [thread:$0]  %s395, 16, %s7, [#allocation4]
    $region33: #{tpu_custom_call.1} parent=1 // pred_fallthru
      _
    // Predicated region
    $region34: #{tpu_custom_call.1} parent=1 // pred_check
      _
    $region35: #{tpu_custom_call.1} parent=1 // pred_check_branch
      %399 = sbr.rel (0) target = $region37
    $region36: #{tpu_custom_call.1} parent=1 // pred_region
      %400 = dma.done [#allocation4], 16
    $region37: #{tpu_custom_call.1} parent=1 // pred_fallthru
      _
    %401 = vsyncpa [#allocation4], 1

</llo_original>
